<compile_context>
chip_gen: v5e
topology: v5e:2x2
jax: 0.10.0
libtpu: 0.0.40
codegen_flags: <defaults>
</compile_context>

<pallas_src>
import functools
import itertools

import numpy as np
import jax
import jax.numpy as jnp
from jax import lax
from jax.experimental import pallas as pl
from jax.experimental.pallas import tpu as pltpu

_LANES = 128
_SENTINEL = 64      # code value that never matches any cell


def _build_cells(a_map, fair_criteria):
    """Trace-time enumeration of (label, doms, group-cell) combinations.

    Each cell is (kind, cmp_val, full_codes):
      kind 'full' : mask = (code == cmp_val)          -- doms (1,1), exact (g0,g1)
      kind 'half' : mask = ((code >> 1) == cmp_val)   -- doms (1,0), g1 bit ignored
      kind 'nog0' : mask = ((code & ~2) == cmp_val)   -- doms (0,1), g0 bit ignored
    full_codes are the exact 5-bit codes belonging to the cell (for counting).
    """
    assert fair_criteria in ("EqOdd", "EqOpp")
    unique_labels = [0, 1] if fair_criteria == "EqOdd" else [0]
    cells = []          # (kind, cmp_val, full_codes)
    block_slices = []   # (start, count) per (label, doms) block
    for lbl in unique_labels:
        for doms in a_map:
            d1, d2 = int(doms[0]), int(doms[1])
            if (d1, d2) == (0, 0):
                continue                      # contributes exactly 0.0
            if (d1, d2) not in ((1, 1), (1, 0), (0, 1)):
                continue                      # torch prints 'Wrong domain', adds nothing
            start = len(cells)
            base = lbl * 16 + d1 * 8 + d2 * 4
            if (d1, d2) == (1, 1):
                for m, n in itertools.product((0, 1), (0, 1)):
                    c = base + m * 2 + n
                    cells.append(("full", c, (c,)))
            elif (d1, d2) == (1, 0):
                for j in (0, 1):
                    cells.append(("half", (base + 2 * j) >> 1,
                                  (base + 2 * j, base + 2 * j + 1)))
            else:  # (0, 1)
                for j in (0, 1):
                    cells.append(("nog0", base + j, (base + j, base + 2 + j)))
            block_slices.append((start, len(cells) - start))
    return cells, block_slices


def _mean_loss_kernel(x_ref, code_ref, out_ref, *, cells, tile_rows,
                      tiles_per_chunk, n_valid, needs_mask, strip_unroll):
    n_cells = len(cells)
    n_strips = tile_rows // 8
    p = pl.program_id(0)
    t = pl.program_id(1)

    @pl.when(t == 0)
    def _init():
        out_ref[...] = jnp.zeros(out_ref.shape, out_ref.dtype)

    need_half = any(k == "half" for k, _, _ in cells)
    need_nog0 = any(k == "nog0" for k, _, _ in cells)

    if needs_mask:
        # flat element index of (sublane, lane) within one (8,128) strip
        strip_iota = (lax.broadcasted_iota(jnp.int32, (8, _LANES), 0) * _LANES
                      + lax.broadcasted_iota(jnp.int32, (8, _LANES), 1))
        tile_base = (p * tiles_per_chunk + t) * (tile_rows * _LANES)

    def strip_body(s, accs):
        row = pl.multiple_of(s * 8, 8)
        x = x_ref[pl.ds(row, 8), :]
        code = code_ref[pl.ds(row, 8), :]
        if needs_mask:
            flat = tile_base + row * _LANES + strip_iota
            code = jnp.where(flat < n_valid, code, _SENTINEL)
        # numerically stable log-sigmoid: min(x,0) - log1p(exp(-|x|))
        ls = jnp.minimum(x, 0.0) - jnp.log1p(jnp.exp(-jnp.abs(x)))
        code_half = (code >> 1) if need_half else None
        code_nog0 = (code & jnp.int32(-3)) if need_nog0 else None   # -3 == ~2
        new = []
        for c_idx, (kind, cmp_val, _) in enumerate(cells):
            if kind == "full":
                m = code == cmp_val
            elif kind == "half":
                m = code_half == cmp_val
            else:  # "nog0"
                m = code_nog0 == cmp_val
            new.append(accs[c_idx] + jnp.where(m, ls, 0.0))
        return tuple(new)

    init = tuple(jnp.zeros((8, _LANES), jnp.float32) for _ in range(n_cells))
    accs = lax.fori_loop(0, n_strips, strip_body, init, unroll=strip_unroll)

    # One accumulator read-modify-write per cell per TILE (not per strip).
    for c_idx in range(n_cells):
        out_ref[0, c_idx * 8:(c_idx + 1) * 8, :] += accs[c_idx]


def _default_parallel_chunks():
    # v7x has 2 TensorCores that the 'parallel' chunk axis can shard across;
    # v5e/v6e are single-TC, so an extra chunk only adds a dummy tile.
    try:
        kind = jax.devices()[0].device_kind.lower()
    except Exception:
        return 1
    return 2 if ("v7" in kind or "tpu7" in kind) else 1


def mean_loss(outputs, labels, sen_groups, ad1, ad2, a_map,
              fair_criteria="EqOdd", tile_rows=512, num_parallel_chunks=None):
    """JAX/Pallas equivalent of MeanLoss(device, fair_criteria).forward(...)."""
    cells, block_slices = _build_cells(a_map, fair_criteria)
    if not cells:
        return jnp.zeros((1,), jnp.float32)
    n_cells = len(cells)

    x = jnp.asarray(outputs, jnp.float32).reshape(-1)
    n = int(x.shape[0])
    if n == 0:
        return jnp.zeros((1,), jnp.float32)

    # ---- categorical streams -> one int32 "cell code" per sample -------------
    def _bits(v):
        v = jnp.asarray(v, jnp.float32).reshape(-1)
        return (v == 1.0).astype(jnp.int32), (v == 0.0) | (v == 1.0)

    lab_b, lab_ok = _bits(labels)
    a1_b, a1_ok = _bits(ad1)
    a2_b, a2_ok = _bits(ad2)
    g0_b, g0_ok = _bits(sen_groups[0])
    g1_b, g1_ok = _bits(sen_groups[1])
    # sen_groups[2] is never used by the math -> never loaded.
    ok = lab_ok & a1_ok & a2_ok & g0_ok & g1_ok
    code = lab_b * 16 + a1_b * 8 + a2_b * 4 + g0_b * 2 + g1_b
    code = jnp.where(ok, code, _SENTINEL)

    # ---- per-cell counts: depend only on the codes, so one fused wrapper pass --
    needed = sorted({fc for _, _, fcs in cells for fc in fcs})
    pos = {c: i for i, c in enumerate(needed)}
    needed_arr = jnp.asarray(needed, jnp.int32)
    hist = jnp.sum((code[:, None] == needed_arr[None, :]).astype(jnp.float32), axis=0)
    cell_cnts = jnp.stack([sum(hist[pos[fc]] for fc in fcs) for _, _, fcs in cells])

    # ---- tiling ---------------------------------------------------------------
    rows = -(-n // _LANES)                              # cdiv(n, 128)
    tr = max(8, (int(tile_rows) // 8) * 8)              # multiple of 8 sublanes
    tr = min(tr, 2048)                                  # keep VMEM tiny even on v7x
    rows8 = -(-rows // 8) * 8
    if rows8 <= tr:
        tr = rows8                                      # tiny input: one exact tile
        rows_padded = rows8
    else:
        rows_padded = rows                              # big input: pad only to 128 lanes
    num_tiles = -(-rows_padded // tr)

    if num_parallel_chunks is None:
        num_parallel_chunks = _default_parallel_chunks()
    par = max(1, min(int(num_parallel_chunks), num_tiles))
    tiles_per_chunk = -(-num_tiles // par)
    needs_mask = (par * tiles_per_chunk * tr * _LANES != n)
    strip_unroll = min(4, tr // 8)

    pad = rows_padded * _LANES - n
    if pad:
        x = jnp.pad(x, (0, pad))
        code = jnp.pad(code, (0, pad), constant_values=_SENTINEL)
    x2 = x.reshape(rows_padded, _LANES)
    code2 = code.reshape(rows_padded, _LANES)

    last_block = num_tiles - 1

    def in_index_map(pi, ti):
        # Dummy tiles (from rounding tiles up to `par` chunks) re-read the last
        # real tile; the kernel's flat-index mask zeroes their contribution.
        return (jnp.minimum(pi * tiles_per_chunk + ti, last_block), 0)

    kernel = functools.partial(
        _mean_loss_kernel, cells=cells, tile_rows=tr,
        tiles_per_chunk=tiles_per_chunk, n_valid=n, needs_mask=needs_mask,
        strip_unroll=strip_unroll)

    in_spec = pl.BlockSpec((tr, _LANES), in_index_map)
    out_spec = pl.BlockSpec((1, n_cells * 8, _LANES), lambda pi, ti: (pi, 0, 0))

    partial_sums = pl.pallas_call(
        kernel,
        out_shape=jax.ShapeDtypeStruct((par, n_cells * 8, _LANES), jnp.float32),
        grid_spec=pltpu.PrefetchScalarGridSpec(
            num_scalar_prefetch=0,
            grid=(par, tiles_per_chunk),
            in_specs=[in_spec, in_spec],
            out_specs=out_spec,
        ),
        compiler_params=pltpu.CompilerParams(
            dimension_semantics=("parallel", "arbitrary"),
            vmem_limit_bytes=32 * 1024 * 1024,
        ),
    )(x2, code2)

    # ---- tiny O(#cells) finalize in plain JAX ---------------------------------
    cell_sums = jnp.sum(partial_sums.reshape(par, n_cells, 8, _LANES), axis=(0, 2, 3))
    valid = (cell_cnts > 0.0).astype(jnp.float32)
    means = cell_sums / jnp.maximum(cell_cnts, 1.0)

    total = jnp.zeros((), jnp.float32)
    for start, count in block_slices:
        for i in range(count):
            for j in range(i + 1, count):
                a, b = start + i, start + j
                total = total + valid[a] * valid[b] * (means[a] - means[b]) ** 2
    return total.reshape(1)


def _mean_loss_ref(outputs, labels, sen_groups, ad1, ad2, a_map, fair_criteria):
    """NumPy reference mirroring the torch control flow (intended semantics)."""
    out = np.asarray(outputs, np.float64)
    ls = np.where(out >= 0, -np.log1p(np.exp(-out)), out - np.log1p(np.exp(out)))
    labels = np.asarray(labels)
    ad1 = np.asarray(ad1)
    ad2 = np.asarray(ad2)
    g = [np.asarray(s) for s in sen_groups]

    def mean_gap(x, y):
        return (x.mean() - y.mean()) ** 2

    def gap_single(o, grp):
        lst = [j for j in range(2) if (grp == j).sum() > 0]
        r = 0.0
        for i, j in itertools.combinations(range(len(lst)), 2):
            r += mean_gap(o[grp == lst[i]], o[grp == lst[j]])
        return r

    def gap_double(o, ga, gb):
        lst = [(m, nn) for m, nn in itertools.product(range(2), range(2))
               if ((ga == m) & (gb == nn)).sum() > 0]
        r = 0.0
        for i, j in itertools.combinations(range(len(lst)), 2):
            mi, ni = lst[i]
            mj, nj = lst[j]
            r += mean_gap(o[(ga == mi) & (gb == ni)], o[(ga == mj) & (gb == nj)])
        return r

    unique_labels = [0, 1] if fair_criteria == "EqOdd" else [0]
    result = 0.0
    for lbl in unique_labels:
        if (labels == lbl).sum() == 0:
            continue
        for doms in a_map:
            sel = (ad1 == doms[0]) & (ad2 == doms[1])
            o = ls[sel]
            lab = labels[sel]
            g0 = g[0][sel]
            g1 = g[1][sel]
            m = lab == lbl
            if list(doms) == [0, 0]:
                pass
            elif list(doms) == [1, 1]:
                result += gap_double(o[m], g0[m], g1[m])
            elif list(doms) == [1, 0]:
                result += gap_single(o[m], g0[m])
            elif list(doms) == [0, 1]:
                result += gap_single(o[m], g1[m])
    return result


if __name__ == "__main__":
    key = jax.random.PRNGKey(0)
    a_map = [[0, 0], [0, 1], [1, 0], [1, 1]]

    def make(n, k):
        ks = jax.random.split(k, 5)
        outputs = jax.random.normal(ks[0], (n,), jnp.float32)
        labels = jax.random.bernoulli(ks[1], 0.5, (n,)).astype(jnp.float32)
        ad1 = jax.random.bernoulli(ks[2], 0.5, (n,)).astype(jnp.float32)
        ad2 = jax.random.bernoulli(ks[3], 0.5, (n,)).astype(jnp.float32)
        sen = jax.random.bernoulli(ks[4], 0.5, (3, n)).astype(jnp.float32)
        return outputs, labels, sen, ad1, ad2

    checks = [
        # (n, fair_criteria, tile_rows, num_parallel_chunks)
        (300, "EqOdd", 512, None),   # ragged tail, single tile
        (2500, "EqOdd", 8, 2),       # multi-tile grid + dummy-tile clamp path
        (256, "EqOpp", 512, None),   # EqOpp label subset
    ]
    k = key
    for n, crit, tr, par in checks:
        k, sub = jax.random.split(k)
        outputs, labels, sen, ad1, ad2 = make(n, sub)
        res = mean_loss(outputs, labels, sen, ad1, ad2, a_map,
                        fair_criteria=crit, tile_rows=tr,
                        num_parallel_chunks=par)
        res = jax.block_until_ready(res)
        ref = _mean_loss_ref(np.array(outputs), np.array(labels), np.array(sen),
                             np.array(ad1), np.array(ad2), a_map, crit)
        got = float(np.array(res)[0])
        assert np.allclose(got, ref, rtol=1e-3, atol=1e-5), (n, crit, got, ref)
    print("KERNEL_OK")
</pallas_src>

<mosaic_0001>
module attributes {stable_mosaic.version = 11 : i64} {
  func.func @_mean_loss_kernel(%arg0: i32, %arg1: i32, %arg2: memref<8x128xf32, #tpu.memory_space<vmem>>, %arg3: memref<8x128xi32, #tpu.memory_space<vmem>>, %arg4: memref<1x128x128xf32, #tpu.memory_space<vmem>>) attributes {dimension_semantics = [#tpu.dimension_semantics<parallel>, #tpu.dimension_semantics<arbitrary>], iteration_bounds = array<i64: 1, 1>, scalar_prefetch = 0 : i64, scratch_operands = 0 : i64, tpu.core_type = #tpu.core_type<tc>, window_params = [{transform_indices = @transform_0, window_bounds = array<i64: 8, 128>}, {transform_indices = @transform_1, window_bounds = array<i64: 8, 128>}, {transform_indices = @transform_2, window_bounds = array<i64: 1, 128, 128>}]} {
    %c0_i32 = arith.constant 0 : i32
    %0 = arith.cmpi eq, %arg1, %c0_i32 : i32
    %1 = arith.extui %0 : i1 to i32
    %c0_i32_0 = arith.constant 0 : i32
    %2 = arith.cmpi ne, %1, %c0_i32_0 : i32
    scf.if %2 {
      %cst_124 = arith.constant 0.000000e+00 : f32
      %229 = vector.broadcast %cst_124 : f32 to vector<1x128x128xf32>
      %c0_125 = arith.constant 0 : index
      %c0_126 = arith.constant 0 : index
      %c0_127 = arith.constant 0 : index
      %230 = vector.load %arg4[%c0_125, %c0_126, %c0_127] : memref<1x128x128xf32, #tpu.memory_space<vmem>>, vector<1x128x128xf32>
      tpu.vector_store %arg4[%c0_125, %c0_126, %c0_127], %229 {strides = array<i32>} : memref<1x128x128xf32, #tpu.memory_space<vmem>>, vector<1x128x128xf32>,
    } else {
    }
    %3 = tpu.iota {dimensions = array<i32: 0>} : vector<8x128xi32>
    %c128_i32 = arith.constant 128 : i32
    %4 = vector.broadcast %c128_i32 : i32 to vector<8x128xi32>
    %5 = arith.muli %3, %4 : vector<8x128xi32>
    %6 = tpu.iota {dimensions = array<i32: 1>} : vector<8x128xi32>
    %7 = arith.addi %5, %6 : vector<8x128xi32>
    %c1_i32 = arith.constant 1 : i32
    %8 = arith.muli %arg0, %c1_i32 : i32
    %9 = arith.addi %8, %arg1 : i32
    %c1024_i32 = arith.constant 1024 : i32
    %10 = arith.muli %9, %c1024_i32 : i32
    %cst = arith.constant 0.000000e+00 : f32
    %11 = vector.broadcast %cst : f32 to vector<8x128xf32>
    %cst_1 = arith.constant 0.000000e+00 : f32
    %12 = vector.broadcast %cst_1 : f32 to vector<8x128xf32>
    %cst_2 = arith.constant 0.000000e+00 : f32
    %13 = vector.broadcast %cst_2 : f32 to vector<8x128xf32>
    %cst_3 = arith.constant 0.000000e+00 : f32
    %14 = vector.broadcast %cst_3 : f32 to vector<8x128xf32>
    %cst_4 = arith.constant 0.000000e+00 : f32
    %15 = vector.broadcast %cst_4 : f32 to vector<8x128xf32>
    %cst_5 = arith.constant 0.000000e+00 : f32
    %16 = vector.broadcast %cst_5 : f32 to vector<8x128xf32>
    %cst_6 = arith.constant 0.000000e+00 : f32
    %17 = vector.broadcast %cst_6 : f32 to vector<8x128xf32>
    %cst_7 = arith.constant 0.000000e+00 : f32
    %18 = vector.broadcast %cst_7 : f32 to vector<8x128xf32>
    %cst_8 = arith.constant 0.000000e+00 : f32
    %19 = vector.broadcast %cst_8 : f32 to vector<8x128xf32>
    %cst_9 = arith.constant 0.000000e+00 : f32
    %20 = vector.broadcast %cst_9 : f32 to vector<8x128xf32>
    %cst_10 = arith.constant 0.000000e+00 : f32
    %21 = vector.broadcast %cst_10 : f32 to vector<8x128xf32>
    %cst_11 = arith.constant 0.000000e+00 : f32
    %22 = vector.broadcast %cst_11 : f32 to vector<8x128xf32>
    %cst_12 = arith.constant 0.000000e+00 : f32
    %23 = vector.broadcast %cst_12 : f32 to vector<8x128xf32>
    %cst_13 = arith.constant 0.000000e+00 : f32
    %24 = vector.broadcast %cst_13 : f32 to vector<8x128xf32>
    %cst_14 = arith.constant 0.000000e+00 : f32
    %25 = vector.broadcast %cst_14 : f32 to vector<8x128xf32>
    %cst_15 = arith.constant 0.000000e+00 : f32
    %26 = vector.broadcast %cst_15 : f32 to vector<8x128xf32>
    %c0_i32_16 = arith.constant 0 : i32
    %c8_i32 = arith.constant 8 : i32
    %27 = arith.muli %c0_i32_16, %c8_i32 : i32
    %28 = tpu.assume_multiple %27, 8 : i32
    %29 = arith.index_cast %28 : i32 to index
    %c0 = arith.constant 0 : index
    %30 = vector.load %arg2[%29, %c0] : memref<8x128xf32, #tpu.memory_space<vmem>>, vector<8x128xf32>
    %31 = arith.index_cast %28 : i32 to index
    %c0_17 = arith.constant 0 : index
    %32 = vector.load %arg3[%31, %c0_17] : memref<8x128xi32, #tpu.memory_space<vmem>>, vector<8x128xi32>
    %c128_i32_18 = arith.constant 128 : i32
    %33 = arith.muli %28, %c128_i32_18 : i32
    %34 = arith.addi %10, %33 : i32
    %35 = vector.broadcast %34 : i32 to vector<8x128xi32>
    %36 = arith.addi %35, %7 : vector<8x128xi32>
    %c300_i32 = arith.constant 300 : i32
    %37 = vector.broadcast %c300_i32 : i32 to vector<8x128xi32>
    %38 = arith.cmpi slt, %36, %37 : vector<8x128xi32>
    %c64_i32 = arith.constant 64 : i32
    %39 = vector.broadcast %c64_i32 : i32 to vector<8x128xi32>
    %40 = arith.select %38, %32, %39 : vector<8x128xi1>, vector<8x128xi32>
    %cst_19 = arith.constant 0.000000e+00 : f32
    %41 = vector.broadcast %cst_19 : f32 to vector<8x128xf32>
    %42 = arith.minimumf %30, %41 : vector<8x128xf32>
    %43 = math.absf %30 : vector<8x128xf32>
    %cst_20 = arith.constant 0.000000e+00 : f32
    %44 = vector.broadcast %cst_20 : f32 to vector<8x128xf32>
    %45 = arith.subf %44, %43 : vector<8x128xf32>
    %46 = math.exp %45 : vector<8x128xf32>
    %47 = math.log1p %46 : vector<8x128xf32>
    %48 = arith.subf %42, %47 : vector<8x128xf32>
    %c1_i32_21 = arith.constant 1 : i32
    %49 = vector.broadcast %c1_i32_21 : i32 to vector<8x128xi32>
    %50 = arith.shrsi %40, %49 : vector<8x128xi32>
    %c-3_i32 = arith.constant -3 : i32
    %51 = vector.broadcast %c-3_i32 : i32 to vector<8x128xi32>
    %52 = arith.andi %40, %51 : vector<8x128xi32>
    %c4_i32 = arith.constant 4 : i32
    %53 = vector.broadcast %c4_i32 : i32 to vector<8x128xi32>
    %54 = arith.cmpi eq, %52, %53 : vector<8x128xi32>
    %cst_22 = arith.constant 0.000000e+00 : f32
    %55 = vector.broadcast %cst_22 : f32 to vector<8x128xf32>
    %56 = arith.select %54, %48, %55 : vector<8x128xi1>, vector<8x128xf32>
    %57 = arith.addf %11, %56 : vector<8x128xf32>
    %c5_i32 = arith.constant 5 : i32
    %58 = vector.broadcast %c5_i32 : i32 to vector<8x128xi32>
    %59 = arith.cmpi eq, %52, %58 : vector<8x128xi32>
    %cst_23 = arith.constant 0.000000e+00 : f32
    %60 = vector.broadcast %cst_23 : f32 to vector<8x128xf32>
    %61 = arith.select %59, %48, %60 : vector<8x128xi1>, vector<8x128xf32>
    %62 = arith.addf %12, %61 : vector<8x128xf32>
    %c4_i32_24 = arith.constant 4 : i32
    %63 = vector.broadcast %c4_i32_24 : i32 to vector<8x128xi32>
    %64 = arith.cmpi eq, %50, %63 : vector<8x128xi32>
    %cst_25 = arith.constant 0.000000e+00 : f32
    %65 = vector.broadcast %cst_25 : f32 to vector<8x128xf32>
    %66 = arith.select %64, %48, %65 : vector<8x128xi1>, vector<8x128xf32>
    %67 = arith.addf %13, %66 : vector<8x128xf32>
    %c5_i32_26 = arith.constant 5 : i32
    %68 = vector.broadcast %c5_i32_26 : i32 to vector<8x128xi32>
    %69 = arith.cmpi eq, %50, %68 : vector<8x128xi32>
    %cst_27 = arith.constant 0.000000e+00 : f32
    %70 = vector.broadcast %cst_27 : f32 to vector<8x128xf32>
    %71 = arith.select %69, %48, %70 : vector<8x128xi1>, vector<8x128xf32>
    %72 = arith.addf %14, %71 : vector<8x128xf32>
    %c12_i32 = arith.constant 12 : i32
    %73 = vector.broadcast %c12_i32 : i32 to vector<8x128xi32>
    %74 = arith.cmpi eq, %40, %73 : vector<8x128xi32>
    %cst_28 = arith.constant 0.000000e+00 : f32
    %75 = vector.broadcast %cst_28 : f32 to vector<8x128xf32>
    %76 = arith.select %74, %48, %75 : vector<8x128xi1>, vector<8x128xf32>
    %77 = arith.addf %15, %76 : vector<8x128xf32>
    %c13_i32 = arith.constant 13 : i32
    %78 = vector.broadcast %c13_i32 : i32 to vector<8x128xi32>
    %79 = arith.cmpi eq, %40, %78 : vector<8x128xi32>
    %cst_29 = arith.constant 0.000000e+00 : f32
    %80 = vector.broadcast %cst_29 : f32 to vector<8x128xf32>
    %81 = arith.select %79, %48, %80 : vector<8x128xi1>, vector<8x128xf32>
    %82 = arith.addf %16, %81 : vector<8x128xf32>
    %c14_i32 = arith.constant 14 : i32
    %83 = vector.broadcast %c14_i32 : i32 to vector<8x128xi32>
    %84 = arith.cmpi eq, %40, %83 : vector<8x128xi32>
    %cst_30 = arith.constant 0.000000e+00 : f32
    %85 = vector.broadcast %cst_30 : f32 to vector<8x128xf32>
    %86 = arith.select %84, %48, %85 : vector<8x128xi1>, vector<8x128xf32>
    %87 = arith.addf %17, %86 : vector<8x128xf32>
    %c15_i32 = arith.constant 15 : i32
    %88 = vector.broadcast %c15_i32 : i32 to vector<8x128xi32>
    %89 = arith.cmpi eq, %40, %88 : vector<8x128xi32>
    %cst_31 = arith.constant 0.000000e+00 : f32
    %90 = vector.broadcast %cst_31 : f32 to vector<8x128xf32>
    %91 = arith.select %89, %48, %90 : vector<8x128xi1>, vector<8x128xf32>
    %92 = arith.addf %18, %91 : vector<8x128xf32>
    %c20_i32 = arith.constant 20 : i32
    %93 = vector.broadcast %c20_i32 : i32 to vector<8x128xi32>
    %94 = arith.cmpi eq, %52, %93 : vector<8x128xi32>
    %cst_32 = arith.constant 0.000000e+00 : f32
    %95 = vector.broadcast %cst_32 : f32 to vector<8x128xf32>
    %96 = arith.select %94, %48, %95 : vector<8x128xi1>, vector<8x128xf32>
    %97 = arith.addf %19, %96 : vector<8x128xf32>
    %c21_i32 = arith.constant 21 : i32
    %98 = vector.broadcast %c21_i32 : i32 to vector<8x128xi32>
    %99 = arith.cmpi eq, %52, %98 : vector<8x128xi32>
    %cst_33 = arith.constant 0.000000e+00 : f32
    %100 = vector.broadcast %cst_33 : f32 to vector<8x128xf32>
    %101 = arith.select %99, %48, %100 : vector<8x128xi1>, vector<8x128xf32>
    %102 = arith.addf %20, %101 : vector<8x128xf32>
    %c12_i32_34 = arith.constant 12 : i32
    %103 = vector.broadcast %c12_i32_34 : i32 to vector<8x128xi32>
    %104 = arith.cmpi eq, %50, %103 : vector<8x128xi32>
    %cst_35 = arith.constant 0.000000e+00 : f32
    %105 = vector.broadcast %cst_35 : f32 to vector<8x128xf32>
    %106 = arith.select %104, %48, %105 : vector<8x128xi1>, vector<8x128xf32>
    %107 = arith.addf %21, %106 : vector<8x128xf32>
    %c13_i32_36 = arith.constant 13 : i32
    %108 = vector.broadcast %c13_i32_36 : i32 to vector<8x128xi32>
    %109 = arith.cmpi eq, %50, %108 : vector<8x128xi32>
    %cst_37 = arith.constant 0.000000e+00 : f32
    %110 = vector.broadcast %cst_37 : f32 to vector<8x128xf32>
    %111 = arith.select %109, %48, %110 : vector<8x128xi1>, vector<8x128xf32>
    %112 = arith.addf %22, %111 : vector<8x128xf32>
    %c28_i32 = arith.constant 28 : i32
    %113 = vector.broadcast %c28_i32 : i32 to vector<8x128xi32>
    %114 = arith.cmpi eq, %40, %113 : vector<8x128xi32>
    %cst_38 = arith.constant 0.000000e+00 : f32
    %115 = vector.broadcast %cst_38 : f32 to vector<8x128xf32>
    %116 = arith.select %114, %48, %115 : vector<8x128xi1>, vector<8x128xf32>
    %117 = arith.addf %23, %116 : vector<8x128xf32>
    %c29_i32 = arith.constant 29 : i32
    %118 = vector.broadcast %c29_i32 : i32 to vector<8x128xi32>
    %119 = arith.cmpi eq, %40, %118 : vector<8x128xi32>
    %cst_39 = arith.constant 0.000000e+00 : f32
    %120 = vector.broadcast %cst_39 : f32 to vector<8x128xf32>
    %121 = arith.select %119, %48, %120 : vector<8x128xi1>, vector<8x128xf32>
    %122 = arith.addf %24, %121 : vector<8x128xf32>
    %c30_i32 = arith.constant 30 : i32
    %123 = vector.broadcast %c30_i32 : i32 to vector<8x128xi32>
    %124 = arith.cmpi eq, %40, %123 : vector<8x128xi32>
    %cst_40 = arith.constant 0.000000e+00 : f32
    %125 = vector.broadcast %cst_40 : f32 to vector<8x128xf32>
    %126 = arith.select %124, %48, %125 : vector<8x128xi1>, vector<8x128xf32>
    %127 = arith.addf %25, %126 : vector<8x128xf32>
    %c31_i32 = arith.constant 31 : i32
    %128 = vector.broadcast %c31_i32 : i32 to vector<8x128xi32>
    %129 = arith.cmpi eq, %40, %128 : vector<8x128xi32>
    %cst_41 = arith.constant 0.000000e+00 : f32
    %130 = vector.broadcast %cst_41 : f32 to vector<8x128xf32>
    %131 = arith.select %129, %48, %130 : vector<8x128xi1>, vector<8x128xf32>
    %132 = arith.addf %26, %131 : vector<8x128xf32>
    %c1_i32_42 = arith.constant 1 : i32
    %c0_43 = arith.constant 0 : index
    %c0_44 = arith.constant 0 : index
    %c0_45 = arith.constant 0 : index
    %133 = vector.load %arg4[%c0_43, %c0_44, %c0_45] : memref<1x128x128xf32, #tpu.memory_space<vmem>>, vector<1x8x128xf32>
    %134 = vector.shape_cast %133 : vector<1x8x128xf32> to vector<8x128xf32>
    %135 = arith.addf %134, %57 : vector<8x128xf32>
    %c0_46 = arith.constant 0 : index
    %c0_47 = arith.constant 0 : index
    %c0_48 = arith.constant 0 : index
    %136 = vector.load %arg4[%c0_46, %c0_47, %c0_48] : memref<1x128x128xf32, #tpu.memory_space<vmem>>, vector<1x8x128xf32>
    %137 = vector.shape_cast %136 : vector<1x8x128xf32> to vector<8x128xf32>
    %138 = vector.shape_cast %135 : vector<8x128xf32> to vector<1x8x128xf32>
    tpu.vector_store %arg4[%c0_46, %c0_47, %c0_48], %138 {strides = array<i32>} : memref<1x128x128xf32, #tpu.memory_space<vmem>>, vector<1x8x128xf32>,
    %c0_49 = arith.constant 0 : index
    %c8 = arith.constant 8 : index
    %c0_50 = arith.constant 0 : index
    %139 = vector.load %arg4[%c0_49, %c8, %c0_50] : memref<1x128x128xf32, #tpu.memory_space<vmem>>, vector<1x8x128xf32>
    %140 = vector.shape_cast %139 : vector<1x8x128xf32> to vector<8x128xf32>
    %141 = arith.addf %140, %62 : vector<8x128xf32>
    %c0_51 = arith.constant 0 : index
    %c8_52 = arith.constant 8 : index
    %c0_53 = arith.constant 0 : index
    %142 = vector.load %arg4[%c0_51, %c8_52, %c0_53] : memref<1x128x128xf32, #tpu.memory_space<vmem>>, vector<1x8x128xf32>
    %143 = vector.shape_cast %142 : vector<1x8x128xf32> to vector<8x128xf32>
    %144 = vector.shape_cast %141 : vector<8x128xf32> to vector<1x8x128xf32>
    tpu.vector_store %arg4[%c0_51, %c8_52, %c0_53], %144 {strides = array<i32>} : memref<1x128x128xf32, #tpu.memory_space<vmem>>, vector<1x8x128xf32>,
    %c0_54 = arith.constant 0 : index
    %c16 = arith.constant 16 : index
    %c0_55 = arith.constant 0 : index
    %145 = vector.load %arg4[%c0_54, %c16, %c0_55] : memref<1x128x128xf32, #tpu.memory_space<vmem>>, vector<1x8x128xf32>
    %146 = vector.shape_cast %145 : vector<1x8x128xf32> to vector<8x128xf32>
    %147 = arith.addf %146, %67 : vector<8x128xf32>
    %c0_56 = arith.constant 0 : index
    %c16_57 = arith.constant 16 : index
    %c0_58 = arith.constant 0 : index
    %148 = vector.load %arg4[%c0_56, %c16_57, %c0_58] : memref<1x128x128xf32, #tpu.memory_space<vmem>>, vector<1x8x128xf32>
    %149 = vector.shape_cast %148 : vector<1x8x128xf32> to vector<8x128xf32>
    %150 = vector.shape_cast %147 : vector<8x128xf32> to vector<1x8x128xf32>
    tpu.vector_store %arg4[%c0_56, %c16_57, %c0_58], %150 {strides = array<i32>} : memref<1x128x128xf32, #tpu.memory_space<vmem>>, vector<1x8x128xf32>,
    %c0_59 = arith.constant 0 : index
    %c24 = arith.constant 24 : index
    %c0_60 = arith.constant 0 : index
    %151 = vector.load %arg4[%c0_59, %c24, %c0_60] : memref<1x128x128xf32, #tpu.memory_space<vmem>>, vector<1x8x128xf32>
    %152 = vector.shape_cast %151 : vector<1x8x128xf32> to vector<8x128xf32>
    %153 = arith.addf %152, %72 : vector<8x128xf32>
    %c0_61 = arith.constant 0 : index
    %c24_62 = arith.constant 24 : index
    %c0_63 = arith.constant 0 : index
    %154 = vector.load %arg4[%c0_61, %c24_62, %c0_63] : memref<1x128x128xf32, #tpu.memory_space<vmem>>, vector<1x8x128xf32>
    %155 = vector.shape_cast %154 : vector<1x8x128xf32> to vector<8x128xf32>
    %156 = vector.shape_cast %153 : vector<8x128xf32> to vector<1x8x128xf32>
    tpu.vector_store %arg4[%c0_61, %c24_62, %c0_63], %156 {strides = array<i32>} : memref<1x128x128xf32, #tpu.memory_space<vmem>>, vector<1x8x128xf32>,
    %c0_64 = arith.constant 0 : index
    %c32 = arith.constant 32 : index
    %c0_65 = arith.constant 0 : index
    %157 = vector.load %arg4[%c0_64, %c32, %c0_65] : memref<1x128x128xf32, #tpu.memory_space<vmem>>, vector<1x8x128xf32>
    %158 = vector.shape_cast %157 : vector<1x8x128xf32> to vector<8x128xf32>
    %159 = arith.addf %158, %77 : vector<8x128xf32>
    %c0_66 = arith.constant 0 : index
    %c32_67 = arith.constant 32 : index
    %c0_68 = arith.constant 0 : index
    %160 = vector.load %arg4[%c0_66, %c32_67, %c0_68] : memref<1x128x128xf32, #tpu.memory_space<vmem>>, vector<1x8x128xf32>
    %161 = vector.shape_cast %160 : vector<1x8x128xf32> to vector<8x128xf32>
    %162 = vector.shape_cast %159 : vector<8x128xf32> to vector<1x8x128xf32>
    tpu.vector_store %arg4[%c0_66, %c32_67, %c0_68], %162 {strides = array<i32>} : memref<1x128x128xf32, #tpu.memory_space<vmem>>, vector<1x8x128xf32>,
    %c0_69 = arith.constant 0 : index
    %c40 = arith.constant 40 : index
    %c0_70 = arith.constant 0 : index
    %163 = vector.load %arg4[%c0_69, %c40, %c0_70] : memref<1x128x128xf32, #tpu.memory_space<vmem>>, vector<1x8x128xf32>
    %164 = vector.shape_cast %163 : vector<1x8x128xf32> to vector<8x128xf32>
    %165 = arith.addf %164, %82 : vector<8x128xf32>
    %c0_71 = arith.constant 0 : index
    %c40_72 = arith.constant 40 : index
    %c0_73 = arith.constant 0 : index
    %166 = vector.load %arg4[%c0_71, %c40_72, %c0_73] : memref<1x128x128xf32, #tpu.memory_space<vmem>>, vector<1x8x128xf32>
    %167 = vector.shape_cast %166 : vector<1x8x128xf32> to vector<8x128xf32>
    %168 = vector.shape_cast %165 : vector<8x128xf32> to vector<1x8x128xf32>
    tpu.vector_store %arg4[%c0_71, %c40_72, %c0_73], %168 {strides = array<i32>} : memref<1x128x128xf32, #tpu.memory_space<vmem>>, vector<1x8x128xf32>,
    %c0_74 = arith.constant 0 : index
    %c48 = arith.constant 48 : index
    %c0_75 = arith.constant 0 : index
    %169 = vector.load %arg4[%c0_74, %c48, %c0_75] : memref<1x128x128xf32, #tpu.memory_space<vmem>>, vector<1x8x128xf32>
    %170 = vector.shape_cast %169 : vector<1x8x128xf32> to vector<8x128xf32>
    %171 = arith.addf %170, %87 : vector<8x128xf32>
    %c0_76 = arith.constant 0 : index
    %c48_77 = arith.constant 48 : index
    %c0_78 = arith.constant 0 : index
    %172 = vector.load %arg4[%c0_76, %c48_77, %c0_78] : memref<1x128x128xf32, #tpu.memory_space<vmem>>, vector<1x8x128xf32>
    %173 = vector.shape_cast %172 : vector<1x8x128xf32> to vector<8x128xf32>
    %174 = vector.shape_cast %171 : vector<8x128xf32> to vector<1x8x128xf32>
    tpu.vector_store %arg4[%c0_76, %c48_77, %c0_78], %174 {strides = array<i32>} : memref<1x128x128xf32, #tpu.memory_space<vmem>>, vector<1x8x128xf32>,
    %c0_79 = arith.constant 0 : index
    %c56 = arith.constant 56 : index
    %c0_80 = arith.constant 0 : index
    %175 = vector.load %arg4[%c0_79, %c56, %c0_80] : memref<1x128x128xf32, #tpu.memory_space<vmem>>, vector<1x8x128xf32>
    %176 = vector.shape_cast %175 : vector<1x8x128xf32> to vector<8x128xf32>
    %177 = arith.addf %176, %92 : vector<8x128xf32>
    %c0_81 = arith.constant 0 : index
    %c56_82 = arith.constant 56 : index
    %c0_83 = arith.constant 0 : index
    %178 = vector.load %arg4[%c0_81, %c56_82, %c0_83] : memref<1x128x128xf32, #tpu.memory_space<vmem>>, vector<1x8x128xf32>
    %179 = vector.shape_cast %178 : vector<1x8x128xf32> to vector<8x128xf32>
    %180 = vector.shape_cast %177 : vector<8x128xf32> to vector<1x8x128xf32>
    tpu.vector_store %arg4[%c0_81, %c56_82, %c0_83], %180 {strides = array<i32>} : memref<1x128x128xf32, #tpu.memory_space<vmem>>, vector<1x8x128xf32>,
    %c0_84 = arith.constant 0 : index
    %c64 = arith.constant 64 : index
    %c0_85 = arith.constant 0 : index
    %181 = vector.load %arg4[%c0_84, %c64, %c0_85] : memref<1x128x128xf32, #tpu.memory_space<vmem>>, vector<1x8x128xf32>
    %182 = vector.shape_cast %181 : vector<1x8x128xf32> to vector<8x128xf32>
    %183 = arith.addf %182, %97 : vector<8x128xf32>
    %c0_86 = arith.constant 0 : index
    %c64_87 = arith.constant 64 : index
    %c0_88 = arith.constant 0 : index
    %184 = vector.load %arg4[%c0_86, %c64_87, %c0_88] : memref<1x128x128xf32, #tpu.memory_space<vmem>>, vector<1x8x128xf32>
    %185 = vector.shape_cast %184 : vector<1x8x128xf32> to vector<8x128xf32>
    %186 = vector.shape_cast %183 : vector<8x128xf32> to vector<1x8x128xf32>
    tpu.vector_store %arg4[%c0_86, %c64_87, %c0_88], %186 {strides = array<i32>} : memref<1x128x128xf32, #tpu.memory_space<vmem>>, vector<1x8x128xf32>,
    %c0_89 = arith.constant 0 : index
    %c72 = arith.constant 72 : index
    %c0_90 = arith.constant 0 : index
    %187 = vector.load %arg4[%c0_89, %c72, %c0_90] : memref<1x128x128xf32, #tpu.memory_space<vmem>>, vector<1x8x128xf32>
    %188 = vector.shape_cast %187 : vector<1x8x128xf32> to vector<8x128xf32>
    %189 = arith.addf %188, %102 : vector<8x128xf32>
    %c0_91 = arith.constant 0 : index
    %c72_92 = arith.constant 72 : index
    %c0_93 = arith.constant 0 : index
    %190 = vector.load %arg4[%c0_91, %c72_92, %c0_93] : memref<1x128x128xf32, #tpu.memory_space<vmem>>, vector<1x8x128xf32>
    %191 = vector.shape_cast %190 : vector<1x8x128xf32> to vector<8x128xf32>
    %192 = vector.shape_cast %189 : vector<8x128xf32> to vector<1x8x128xf32>
    tpu.vector_store %arg4[%c0_91, %c72_92, %c0_93], %192 {strides = array<i32>} : memref<1x128x128xf32, #tpu.memory_space<vmem>>, vector<1x8x128xf32>,
    %c0_94 = arith.constant 0 : index
    %c80 = arith.constant 80 : index
    %c0_95 = arith.constant 0 : index
    %193 = vector.load %arg4[%c0_94, %c80, %c0_95] : memref<1x128x128xf32, #tpu.memory_space<vmem>>, vector<1x8x128xf32>
    %194 = vector.shape_cast %193 : vector<1x8x128xf32> to vector<8x128xf32>
    %195 = arith.addf %194, %107 : vector<8x128xf32>
    %c0_96 = arith.constant 0 : index
    %c80_97 = arith.constant 80 : index
    %c0_98 = arith.constant 0 : index
    %196 = vector.load %arg4[%c0_96, %c80_97, %c0_98] : memref<1x128x128xf32, #tpu.memory_space<vmem>>, vector<1x8x128xf32>
    %197 = vector.shape_cast %196 : vector<1x8x128xf32> to vector<8x128xf32>
    %198 = vector.shape_cast %195 : vector<8x128xf32> to vector<1x8x128xf32>
    tpu.vector_store %arg4[%c0_96, %c80_97, %c0_98], %198 {strides = array<i32>} : memref<1x128x128xf32, #tpu.memory_space<vmem>>, vector<1x8x128xf32>,
    %c0_99 = arith.constant 0 : index
    %c88 = arith.constant 88 : index
    %c0_100 = arith.constant 0 : index
    %199 = vector.load %arg4[%c0_99, %c88, %c0_100] : memref<1x128x128xf32, #tpu.memory_space<vmem>>, vector<1x8x128xf32>
    %200 = vector.shape_cast %199 : vector<1x8x128xf32> to vector<8x128xf32>
    %201 = arith.addf %200, %112 : vector<8x128xf32>
    %c0_101 = arith.constant 0 : index
    %c88_102 = arith.constant 88 : index
    %c0_103 = arith.constant 0 : index
    %202 = vector.load %arg4[%c0_101, %c88_102, %c0_103] : memref<1x128x128xf32, #tpu.memory_space<vmem>>, vector<1x8x128xf32>
    %203 = vector.shape_cast %202 : vector<1x8x128xf32> to vector<8x128xf32>
    %204 = vector.shape_cast %201 : vector<8x128xf32> to vector<1x8x128xf32>
    tpu.vector_store %arg4[%c0_101, %c88_102, %c0_103], %204 {strides = array<i32>} : memref<1x128x128xf32, #tpu.memory_space<vmem>>, vector<1x8x128xf32>,
    %c0_104 = arith.constant 0 : index
    %c96 = arith.constant 96 : index
    %c0_105 = arith.constant 0 : index
    %205 = vector.load %arg4[%c0_104, %c96, %c0_105] : memref<1x128x128xf32, #tpu.memory_space<vmem>>, vector<1x8x128xf32>
    %206 = vector.shape_cast %205 : vector<1x8x128xf32> to vector<8x128xf32>
    %207 = arith.addf %206, %117 : vector<8x128xf32>
    %c0_106 = arith.constant 0 : index
    %c96_107 = arith.constant 96 : index
    %c0_108 = arith.constant 0 : index
    %208 = vector.load %arg4[%c0_106, %c96_107, %c0_108] : memref<1x128x128xf32, #tpu.memory_space<vmem>>, vector<1x8x128xf32>
    %209 = vector.shape_cast %208 : vector<1x8x128xf32> to vector<8x128xf32>
    %210 = vector.shape_cast %207 : vector<8x128xf32> to vector<1x8x128xf32>
    tpu.vector_store %arg4[%c0_106, %c96_107, %c0_108], %210 {strides = array<i32>} : memref<1x128x128xf32, #tpu.memory_space<vmem>>, vector<1x8x128xf32>,
    %c0_109 = arith.constant 0 : index
    %c104 = arith.constant 104 : index
    %c0_110 = arith.constant 0 : index
    %211 = vector.load %arg4[%c0_109, %c104, %c0_110] : memref<1x128x128xf32, #tpu.memory_space<vmem>>, vector<1x8x128xf32>
    %212 = vector.shape_cast %211 : vector<1x8x128xf32> to vector<8x128xf32>
    %213 = arith.addf %212, %122 : vector<8x128xf32>
    %c0_111 = arith.constant 0 : index
    %c104_112 = arith.constant 104 : index
    %c0_113 = arith.constant 0 : index
    %214 = vector.load %arg4[%c0_111, %c104_112, %c0_113] : memref<1x128x128xf32, #tpu.memory_space<vmem>>, vector<1x8x128xf32>
    %215 = vector.shape_cast %214 : vector<1x8x128xf32> to vector<8x128xf32>
    %216 = vector.shape_cast %213 : vector<8x128xf32> to vector<1x8x128xf32>
    tpu.vector_store %arg4[%c0_111, %c104_112, %c0_113], %216 {strides = array<i32>} : memref<1x128x128xf32, #tpu.memory_space<vmem>>, vector<1x8x128xf32>,
    %c0_114 = arith.constant 0 : index
    %c112 = arith.constant 112 : index
    %c0_115 = arith.constant 0 : index
    %217 = vector.load %arg4[%c0_114, %c112, %c0_115] : memref<1x128x128xf32, #tpu.memory_space<vmem>>, vector<1x8x128xf32>
    %218 = vector.shape_cast %217 : vector<1x8x128xf32> to vector<8x128xf32>
    %219 = arith.addf %218, %127 : vector<8x128xf32>
    %c0_116 = arith.constant 0 : index
    %c112_117 = arith.constant 112 : index
    %c0_118 = arith.constant 0 : index
    %220 = vector.load %arg4[%c0_116, %c112_117, %c0_118] : memref<1x128x128xf32, #tpu.memory_space<vmem>>, vector<1x8x128xf32>
    %221 = vector.shape_cast %220 : vector<1x8x128xf32> to vector<8x128xf32>
    %222 = vector.shape_cast %219 : vector<8x128xf32> to vector<1x8x128xf32>
    tpu.vector_store %arg4[%c0_116, %c112_117, %c0_118], %222 {strides = array<i32>} : memref<1x128x128xf32, #tpu.memory_space<vmem>>, vector<1x8x128xf32>,
    %c0_119 = arith.constant 0 : index
    %c120 = arith.constant 120 : index
    %c0_120 = arith.constant 0 : index
    %223 = vector.load %arg4[%c0_119, %c120, %c0_120] : memref<1x128x128xf32, #tpu.memory_space<vmem>>, vector<1x8x128xf32>
    %224 = vector.shape_cast %223 : vector<1x8x128xf32> to vector<8x128xf32>
    %225 = arith.addf %224, %132 : vector<8x128xf32>
    %c0_121 = arith.constant 0 : index
    %c120_122 = arith.constant 120 : index
    %c0_123 = arith.constant 0 : index
    %226 = vector.load %arg4[%c0_121, %c120_122, %c0_123] : memref<1x128x128xf32, #tpu.memory_space<vmem>>, vector<1x8x128xf32>
    %227 = vector.shape_cast %226 : vector<1x8x128xf32> to vector<8x128xf32>
    %228 = vector.shape_cast %225 : vector<8x128xf32> to vector<1x8x128xf32>
    tpu.vector_store %arg4[%c0_121, %c120_122, %c0_123], %228 {strides = array<i32>} : memref<1x128x128xf32, #tpu.memory_space<vmem>>, vector<1x8x128xf32>,
    return
  }
  func.func @transform_0(%arg0: i32, %arg1: i32) -> (i32, i32) {
    %c1_i32 = arith.constant 1 : i32
    %0 = arith.muli %arg0, %c1_i32 : i32
    %1 = arith.addi %0, %arg1 : i32
    %c0_i32 = arith.constant 0 : i32
    %2 = arith.minsi %1, %c0_i32 : i32
    %c0_i32_0 = arith.constant 0 : i32
    %c0_i32_1 = arith.constant 0 : i32
    return %2, %c0_i32_0 : i32, i32
  }
  func.func @transform_1(%arg0: i32, %arg1: i32) -> (i32, i32) {
    %c1_i32 = arith.constant 1 : i32
    %0 = arith.muli %arg0, %c1_i32 : i32
    %1 = arith.addi %0, %arg1 : i32
    %c0_i32 = arith.constant 0 : i32
    %2 = arith.minsi %1, %c0_i32 : i32
    %c0_i32_0 = arith.constant 0 : i32
    %c0_i32_1 = arith.constant 0 : i32
    return %2, %c0_i32_0 : i32, i32
  }
  func.func @transform_2(%arg0: i32, %arg1: i32) -> (i32, i32, i32) {
    %c0_i32 = arith.constant 0 : i32
    %c0_i32_0 = arith.constant 0 : i32
    %c0_i32_1 = arith.constant 0 : i32
    return %arg0, %c0_i32, %c0_i32_0 : i32, i32, i32
  }
}

</mosaic_0001>

<llo_original>
// kernel: tpu_custom_call.1
$region0: #{tpu_custom_call.1}
  #allocation0 [shape = 'u32[]', space=smem, size = 0x4, offset = 0x4, fixed_abs, tag = 'smem constant byte address 0x4 - core index']
  #allocation1 [shape = 'u32[72,128]{1,0:T(1,128)}', space=vmem, size = 0x9000, scoped, tag = 'internal scratch']
  %s0 = inlined_call_operand.hbm [shape: f32[8,128], index: 0, kind: input, shape index: {}]
  %s1 = inlined_call_operand.hbm [shape: s32[8,128], index: 1, kind: input, shape index: {}]
  %s2 = inlined_call_operand.hbm [shape: f32[1,128,128], index: 2, kind: output, shape index: {}]
  %s3 = sld [smem:[#allocation0]]
  $region30: #{tpu_custom_call.1} parent=0
    _
  %s5 = ssub.s32 1, %s3
  %s6 = scalar_select 0, %s5, %s3
  $region1: #{tpu_custom_call.1} parent=0
    #allocation2 [shape = 'u8[4096]{0}', space=vmem, size = 0x1000, scoped, tag = 'input window, operand 0, single buffered']
    #allocation3 [shape = 's32[1]{0}', space=sflag, size = 0x4, scoped, tag = 'scoped memory for tpu_custom_call.1']
    #allocation4 [shape = 's32[1]{0}', space=sflag, size = 0x4, scoped, tag = 'scoped memory for tpu_custom_call.1']
    #allocation5 [shape = 'u8[4096]{0}', space=vmem, size = 0x1000, scoped, tag = 'input window, operand 1, single buffered']
    #allocation6 [shape = 's32[1]{0}', space=sflag, size = 0x4, scoped, tag = 'scoped memory for tpu_custom_call.1']
    #allocation7 [shape = 'u8[65536]{0}', space=vmem, size = 0x10000, scoped, tag = 'output window, operand 0, single buffered']
    %7 = vsyncpa [#allocation3], 0
    %8 = vsyncpa [#allocation6], 0
    %9 = vsyncpa [#allocation4], 0
    // Predicated region
    $region2: #{tpu_custom_call.1} parent=1 // pred_check
      _
    $region3: #{tpu_custom_call.1} parent=1 // pred_check_branch
      %11 = sbr.rel (0) target = $region5
    $region4: #{tpu_custom_call.1} parent=1 // pred_region
      %s12 = sadd.s32 0, 0
      %p13 = scmp.lt.s32.totalorder %s12, 0
      %s14 = scalar_select %p13, %s12, 0
      %16 = vsyncadd [#allocation3], 0
      %s17 = smul.addr %s14, 8
      %s18 = scalar_lea.hbm %s0, %s17
      %s20 = sshll.u32 %s18, 4
      %s21 = int_to_ptr.hbm [resolvable:$true] %s20
      %s22 = sshll.u32 [#allocation2], 4
      %s23 = int_to_ptr.vmem [resolvable:$true] %s22
      %25 = dma.hbm_to_vmem [thread:$0]  %s21, 128, %s23, [#allocation3]
    $region5: #{tpu_custom_call.1} parent=1 // pred_fallthru
      _
    // Predicated region
    $region6: #{tpu_custom_call.1} parent=1 // pred_check
      _
    $region7: #{tpu_custom_call.1} parent=1 // pred_check_branch
      %27 = sbr.rel (0) target = $region9
    $region8: #{tpu_custom_call.1} parent=1 // pred_region
      %s28 = sadd.s32 0, 0
      %p29 = scmp.lt.s32.totalorder %s28, 0
      %s30 = scalar_select %p29, %s28, 0
      %32 = vsyncadd [#allocation6], 0
      %s33 = smul.addr %s30, 8
      %s34 = scalar_lea.hbm %s1, %s33
      %s36 = sshll.u32 %s34, 4
      %s37 = int_to_ptr.hbm [resolvable:$true] %s36
      %s38 = sshll.u32 [#allocation5], 4
      %s39 = int_to_ptr.vmem [resolvable:$true] %s38
      %41 = dma.hbm_to_vmem [thread:$0]  %s37, 128, %s39, [#allocation6]
    $region9: #{tpu_custom_call.1} parent=1 // pred_fallthru
      _
    // Predicated region
    $region10: #{tpu_custom_call.1} parent=1 // pred_check
      _
    $region11: #{tpu_custom_call.1} parent=1 // pred_check_branch
      %43 = sbr.rel (0) target = $region13
    $region12: #{tpu_custom_call.1} parent=1 // pred_region
      %45 = dma.done [#allocation3], 128
    $region13: #{tpu_custom_call.1} parent=1 // pred_fallthru
      _
    // Predicated region
    $region14: #{tpu_custom_call.1} parent=1 // pred_check
      _
    $region15: #{tpu_custom_call.1} parent=1 // pred_check_branch
      %47 = sbr.rel (0) target = $region17
    $region16: #{tpu_custom_call.1} parent=1 // pred_region
      %49 = dma.done [#allocation6], 128
    $region17: #{tpu_custom_call.1} parent=1 // pred_fallthru
      _
    %s50 = sadd.s32 0, 0
    %p51 = scmp.lt.s32.totalorder %s50, 0
    %s52 = scalar_select %p51, %s50, 0
    %s53 = sadd.s32 0, 0
    %p54 = scmp.lt.s32.totalorder %s53, 0
    %s55 = scalar_select %p54, %s53, 0
    %p56 = scmp.eq.s32.totalorder 0, 0
    // Predicated region
    $region18: #{tpu_custom_call.1} parent=1 // pred_check
      %p57 = pneg %p56
    $region19: #{tpu_custom_call.1} parent=1 // pred_check_branch
      %59 = sbr.rel (%p57) target = $region21
    $region20: #{tpu_custom_call.1} parent=1 // pred_region
      %60 = vst [vmem:[#allocation7] sm:$0xff] 0.0
      %61 = vst [vmem:[#allocation7 + $0x8] sm:$0xff] 0.0
      %62 = vst [vmem:[#allocation7 + $0x10] sm:$0xff] 0.0
      %63 = vst [vmem:[#allocation7 + $0x18] sm:$0xff] 0.0
      %64 = vst [vmem:[#allocation7 + $0x20] sm:$0xff] 0.0
      %65 = vst [vmem:[#allocation7 + $0x28] sm:$0xff] 0.0
      %66 = vst [vmem:[#allocation7 + $0x30] sm:$0xff] 0.0
      %67 = vst [vmem:[#allocation7 + $0x38] sm:$0xff] 0.0
      %68 = vst [vmem:[#allocation7 + $0x40] sm:$0xff] 0.0
      %69 = vst [vmem:[#allocation7 + $0x48] sm:$0xff] 0.0
      %70 = vst [vmem:[#allocation7 + $0x50] sm:$0xff] 0.0
      %71 = vst [vmem:[#allocation7 + $0x58] sm:$0xff] 0.0
      %72 = vst [vmem:[#allocation7 + $0x60] sm:$0xff] 0.0
      %73 = vst [vmem:[#allocation7 + $0x68] sm:$0xff] 0.0
      %74 = vst [vmem:[#allocation7 + $0x70] sm:$0xff] 0.0
      %75 = vst [vmem:[#allocation7 + $0x78] sm:$0xff] 0.0
    $region21: #{tpu_custom_call.1} parent=1 // pred_fallthru
      _
    %v76 = vlaneseq
    %v77 = vshrl.u32 %v76, 7
    %v78 = vmul.u32 %v77, 128
    %v79 = vlaneseq
    %v80 = vand.u32 %v79, 127
    %v81 = vadd.s32 %v78, %v80
    %s82 = sadd.s32 0, 0
    %s83 = smul.u32 %s82, 1024
    %v84 = vld [vmem:[#allocation2] sm:$0xff]
    %v85 = vld [vmem:[#allocation5] sm:$0xff]
    %s86 = smul.u32 0, 128
    %s87 = sadd.s32 %s83, %s86
    %v88 = vstv %s87
    %v89 = vadd.s32 %v88, %v81
    %vm90 = vcmp.lt.s32.totalorder %v89, 300
    %v91 = vsel %vm90, %v85, 64
    %v92 = vmin.f32 %v84, 0.0
    %v93 = vand.u32 2147483647, %v84
    %v94 = vsub.f32 0.0, %v93
    %v95 = vmul.f32 %v94, 1.442695
    %v96 = vpow.pop %v95
    %v97 = vadd.f32 %v96, 1.0
    %v98 = vlog2.pop %v97
    %v99 = vmul.f32 %v98, 0.6931472
    %v100 = vmul.f32 -0.5, %v96
    %v101 = vadd.f32 %v100, 1.0
    %v102 = vmul.f32 %v101, %v96
    %v103 = vand.u32 2147483647, %v96
    %vm104 = vcmp.lt.f32.partialorder %v103, 0.0004427343
    %v105 = vsel %vm104, %v102, %v99
    %v106 = vsub.f32 %v92, %v105
    %v107 = vshra.s32 %v91, 1
    %v108 = vand.u32 %v91, 4294967293
    %vm109 = vcmp.eq.s32.totalorder %v108, 4
    %v110 = vsel %vm109, %v106, 0.0
    %v111 = vadd.f32 %v110, 0.0
    %vm112 = vcmp.eq.s32.totalorder %v108, 5
    %v113 = vsel %vm112, %v106, 0.0
    %v114 = vadd.f32 %v113, 0.0
    %vm115 = vcmp.eq.s32.totalorder %v107, 4
    %v116 = vsel %vm115, %v106, 0.0
    %v117 = vadd.f32 %v116, 0.0
    %vm118 = vcmp.eq.s32.totalorder %v107, 5
    %v119 = vsel %vm118, %v106, 0.0
    %v120 = vadd.f32 %v119, 0.0
    %vm121 = vcmp.eq.s32.totalorder %v91, 12
    %v122 = vsel %vm121, %v106, 0.0
    %v123 = vadd.f32 %v122, 0.0
    %vm124 = vcmp.eq.s32.totalorder %v91, 13
    %v125 = vsel %vm124, %v106, 0.0
    %v126 = vadd.f32 %v125, 0.0
    %vm127 = vcmp.eq.s32.totalorder %v91, 14
    %v128 = vsel %vm127, %v106, 0.0
    %v129 = vadd.f32 %v128, 0.0
    %vm130 = vcmp.eq.s32.totalorder %v91, 15
    %v131 = vsel %vm130, %v106, 0.0
    %v132 = vadd.f32 %v131, 0.0
    %vm133 = vcmp.eq.s32.totalorder %v108, 20
    %v134 = vsel %vm133, %v106, 0.0
    %v135 = vadd.f32 %v134, 0.0
    %vm136 = vcmp.eq.s32.totalorder %v108, 21
    %v137 = vsel %vm136, %v106, 0.0
    %v138 = vadd.f32 %v137, 0.0
    %vm139 = vcmp.eq.s32.totalorder %v107, 12
    %v140 = vsel %vm139, %v106, 0.0
    %v141 = vadd.f32 %v140, 0.0
    %vm142 = vcmp.eq.s32.totalorder %v107, 13
    %v143 = vsel %vm142, %v106, 0.0
    %v144 = vadd.f32 %v143, 0.0
    %vm145 = vcmp.eq.s32.totalorder %v91, 28
    %v146 = vsel %vm145, %v106, 0.0
    %v147 = vadd.f32 %v146, 0.0
    %vm148 = vcmp.eq.s32.totalorder %v91, 29
    %v149 = vsel %vm148, %v106, 0.0
    %v150 = vadd.f32 %v149, 0.0
    %vm151 = vcmp.eq.s32.totalorder %v91, 30
    %v152 = vsel %vm151, %v106, 0.0
    %v153 = vadd.f32 %v152, 0.0
    %vm154 = vcmp.eq.s32.totalorder %v91, 31
    %v155 = vsel %vm154, %v106, 0.0
    %v156 = vadd.f32 %v155, 0.0
    %v157 = vld [vmem:[#allocation7] sm:$0xff]
    %v158 = vadd.f32 %v157, %v111
    %159 = vst [vmem:[#allocation7] sm:$0xff] %v158
    %v160 = vld [vmem:[#allocation7 + $0x8] sm:$0xff]
    %v161 = vadd.f32 %v160, %v114
    %162 = vst [vmem:[#allocation7 + $0x8] sm:$0xff] %v161
    %v163 = vld [vmem:[#allocation7 + $0x10] sm:$0xff]
    %v164 = vadd.f32 %v163, %v117
    %165 = vst [vmem:[#allocation7 + $0x10] sm:$0xff] %v164
    %v166 = vld [vmem:[#allocation7 + $0x18] sm:$0xff]
    %v167 = vadd.f32 %v166, %v120
    %168 = vst [vmem:[#allocation7 + $0x18] sm:$0xff] %v167
    %v169 = vld [vmem:[#allocation7 + $0x20] sm:$0xff]
    %v170 = vadd.f32 %v169, %v123
    %171 = vst [vmem:[#allocation7 + $0x20] sm:$0xff] %v170
    %v172 = vld [vmem:[#allocation7 + $0x28] sm:$0xff]
    %v173 = vadd.f32 %v172, %v126
    %174 = vst [vmem:[#allocation7 + $0x28] sm:$0xff] %v173
    %v175 = vld [vmem:[#allocation7 + $0x30] sm:$0xff]
    %v176 = vadd.f32 %v175, %v129
    %177 = vst [vmem:[#allocation7 + $0x30] sm:$0xff] %v176
    %v178 = vld [vmem:[#allocation7 + $0x38] sm:$0xff]
    %v179 = vadd.f32 %v178, %v132
    %180 = vst [vmem:[#allocation7 + $0x38] sm:$0xff] %v179
    %v181 = vld [vmem:[#allocation7 + $0x40] sm:$0xff]
    %v182 = vadd.f32 %v181, %v135
    %183 = vst [vmem:[#allocation7 + $0x40] sm:$0xff] %v182
    %v184 = vld [vmem:[#allocation7 + $0x48] sm:$0xff]
    %v185 = vadd.f32 %v184, %v138
    %186 = vst [vmem:[#allocation7 + $0x48] sm:$0xff] %v185
    %v187 = vld [vmem:[#allocation7 + $0x50] sm:$0xff]
    %v188 = vadd.f32 %v187, %v141
    %189 = vst [vmem:[#allocation7 + $0x50] sm:$0xff] %v188
    %v190 = vld [vmem:[#allocation7 + $0x58] sm:$0xff]
    %v191 = vadd.f32 %v190, %v144
    %192 = vst [vmem:[#allocation7 + $0x58] sm:$0xff] %v191
    %v193 = vld [vmem:[#allocation7 + $0x60] sm:$0xff]
    %v194 = vadd.f32 %v193, %v147
    %195 = vst [vmem:[#allocation7 + $0x60] sm:$0xff] %v194
    %v196 = vld [vmem:[#allocation7 + $0x68] sm:$0xff]
    %v197 = vadd.f32 %v196, %v150
    %198 = vst [vmem:[#allocation7 + $0x68] sm:$0xff] %v197
    %v199 = vld [vmem:[#allocation7 + $0x70] sm:$0xff]
    %v200 = vadd.f32 %v199, %v153
    %201 = vst [vmem:[#allocation7 + $0x70] sm:$0xff] %v200
    %v202 = vld [vmem:[#allocation7 + $0x78] sm:$0xff]
    %v203 = vadd.f32 %v202, %v156
    %204 = vst [vmem:[#allocation7 + $0x78] sm:$0xff] %v203
    // Predicated region
    $region22: #{tpu_custom_call.1} parent=1 // pred_check
      _
    $region23: #{tpu_custom_call.1} parent=1 // pred_check_branch
      %206 = sbr.rel (0) target = $region25
    $region24: #{tpu_custom_call.1} parent=1 // pred_region
      %208 = vsyncadd [#allocation4], 0
      %s209 = sshll.u32 [#allocation7], 4
      %s210 = int_to_ptr.vmem [resolvable:$true] %s209
      %s211 = sshll.u32 %s2, 4
      %s212 = int_to_ptr.hbm [resolvable:$true] %s211
      %217 = dma.vmem_to_hbm [thread:$0]  %s210, 2048, %s212, [#allocation4], 128, 128, 8
    $region25: #{tpu_custom_call.1} parent=1 // pred_fallthru
      _
    // Predicated region
    $region26: #{tpu_custom_call.1} parent=1 // pred_check
      _
    $region27: #{tpu_custom_call.1} parent=1 // pred_check_branch
      %219 = sbr.rel (0) target = $region29
    $region28: #{tpu_custom_call.1} parent=1 // pred_region
      %221 = dma.done [#allocation4], 2048
    $region29: #{tpu_custom_call.1} parent=1 // pred_fallthru
      _
    %222 = vsyncpa [#allocation3], 1
    %223 = vsyncpa [#allocation6], 1
    %224 = vsyncpa [#allocation4], 1

</llo_original>
